<compile_context>
chip_gen: v6e
topology: v6e:2x2x1
jax: 0.10.0
libtpu: 0.0.40
codegen_flags: <defaults>
</compile_context>

<pallas_src>
import functools

import jax
import jax.numpy as jnp
from jax.experimental import pallas as pl
from jax.experimental.pallas import tpu as pltpu


def _rmsnorm_kernel(x_ref, w_ref, o_ref, *, eps: float):
    # x_ref: (row_tile, D), w_ref: (1, D) float32, o_ref: (row_tile, D)
    x = x_ref[...].astype(jnp.float32)
    w = w_ref[...]  # already float32 (cast hoisted to the wrapper)
    # mean over last dim, keepdims -> matches torch .pow(2).mean(-1, keepdim=True)
    ms = jnp.mean(x * x, axis=-1, keepdims=True)
    inv = jax.lax.rsqrt(ms + eps)  # EUP slot; off the critical (DMA) path
    o_ref[...] = (x * inv * w).astype(o_ref.dtype)


def _sublane(dtype) -> int:
    itemsize = jnp.dtype(dtype).itemsize
    return {4: 8, 2: 16, 1: 32}.get(itemsize, 8)


def _vmem_budget_and_limit() -> tuple[int, int]:
    """Generation-aware (tiling budget, scoped vmem limit) in bytes."""
    cap = None
    try:
        info = pltpu.get_tpu_info()
        cap = int(getattr(info, "vmem_capacity_bytes", 0)) or None
    except Exception:
        cap = None
    if cap is None:
        # Conservative fallback: assume v7x-sized per-TensorCore VMEM (64 MiB).
        cap = 64 * 1024 * 1024
    # Tiling budget ~= half of physical VMEM (double-buffered tiles + f32
    # working set must fit); scoped limit ~= 3/4 of physical.
    #   128 MiB parts (v5e/v6e): budget 64 MiB, limit 96 MiB.
    #    64 MiB parts (v7x):     budget 32 MiB, limit 48 MiB.
    budget = min(cap // 2, 64 * 1024 * 1024)
    limit = min((cap * 3) // 4, 96 * 1024 * 1024)
    return budget, limit


def _choose_row_tile(rows: int, d: int, dtype, budget_bytes: int) -> int:
    """Row tile targeting ~8 MiB of streamed bytes per grid step, bounded by
    a double-buffered VMEM footprint estimate, rounded to sublane packing."""
    sub = _sublane(dtype)
    itemsize = jnp.dtype(dtype).itemsize

    # Per-row VMEM: 2x input + 2x output (double-buffered) + in-body f32
    # working set. For f32 inputs the astype(f32) is a no-op -> reserve one
    # f32 tile; for narrower dtypes reserve two (the f32 cast of x + a temp).
    inter_bytes = 4 if itemsize >= 4 else 8
    per_row_vmem = d * (2 * itemsize + 2 * itemsize + inter_bytes)

    # Charge the (tiny, double-buffered, f32) weight block to the same budget.
    budget = max(budget_bytes - 2 * d * 4, per_row_vmem * sub)
    vmem_rows = budget // max(per_row_vmem, 1)

    # ~8 MiB of (input + output) HBM traffic per grid step amortizes the
    # ~0.35 us per-step overhead (>=85% of measured HBM roofline).
    target_stream_bytes = 8 * 1024 * 1024
    stream_rows = target_stream_bytes // max(2 * d * itemsize, 1)

    tile = max(sub, min(vmem_rows, stream_rows))
    tile = max(sub, (tile // sub) * sub)

    rows_rounded = ((rows + sub - 1) // sub) * sub
    # Keep >= 2 grid steps whenever possible so the "parallel" row axis can be
    # sharded over v7x's two TensorCores.
    if rows_rounded >= 2 * sub:
        half = max(sub, ((rows_rounded // 2) // sub) * sub)
        tile = min(tile, half)
    return int(min(tile, rows_rounded))


def rmsnorm(x: jax.Array, weight: jax.Array, eps: float = 1e-5,
            row_tile: int | None = None) -> jax.Array:
    """RMSNorm over the last axis of x, scaled by `weight` (shape (d_model,))."""
    orig_shape = x.shape
    d = orig_shape[-1]
    rows = 1
    for s in orig_shape[:-1]:
        rows *= s

    x2d = x.reshape(rows, d)
    w2d = weight.reshape(1, d).astype(jnp.float32)  # cast once, not per tile

    budget_bytes, vmem_limit_bytes = _vmem_budget_and_limit()
    if row_tile is None:
        row_tile = _choose_row_tile(rows, d, x.dtype, budget_bytes)

    grid = (pl.cdiv(rows, row_tile),)  # ragged tail handled by Pallas masking

    kernel = functools.partial(_rmsnorm_kernel, eps=eps)

    out = pl.pallas_call(
        kernel,
        out_shape=jax.ShapeDtypeStruct((rows, d), x.dtype),
        grid_spec=pltpu.PrefetchScalarGridSpec(
            num_scalar_prefetch=0,
            grid=grid,
            in_specs=[
                pl.BlockSpec((row_tile, d), lambda i: (i, 0)),
                pl.BlockSpec((1, d), lambda i: (0, 0)),  # constant index: fetched once
            ],
            out_specs=pl.BlockSpec((row_tile, d), lambda i: (i, 0)),
        ),
        compiler_params=pltpu.CompilerParams(
            # Rows are independent -> parallel (v7x: split across 2 TCs).
            dimension_semantics=("parallel",),
            vmem_limit_bytes=int(vmem_limit_bytes),
        ),
    )(x2d, w2d)

    return out.reshape(orig_shape)


def rmsnorm_ref(x, weight, eps=1e-5):
    xf = x.astype(jnp.float32)
    ms = jnp.mean(xf * xf, axis=-1, keepdims=True)
    return (xf * jax.lax.rsqrt(ms + eps) * weight.astype(jnp.float32)).astype(x.dtype)


if __name__ == "__main__":
    key = jax.random.PRNGKey(0)

    # Small, lane-dense test shape consistent with the module (d_model mult of 128).
    batch, seq, d_model = 2, 8, 128
    x = jax.random.normal(key, (batch, seq, d_model), dtype=jnp.float32)
    weight = jnp.ones((d_model,), dtype=jnp.float32)  # matches torch.ones(d_model)

    out = jax.block_until_ready(rmsnorm(x, weight, eps=1e-5))
    ref = rmsnorm_ref(x, weight, eps=1e-5)
    assert out.shape == x.shape
    assert jnp.allclose(out, ref, atol=1e-5, rtol=1e-5), "mismatch vs reference"

    # Ragged-tail path (rows not a multiple of the row tile).
    x2 = jax.random.normal(jax.random.PRNGKey(1), (3, 5, d_model), dtype=jnp.float32)
    out2 = jax.block_until_ready(rmsnorm(x2, weight, eps=1e-5))
    ref2 = rmsnorm_ref(x2, weight, eps=1e-5)
    assert jnp.allclose(out2, ref2, atol=1e-5, rtol=1e-5), "ragged-tail mismatch"

    # bf16 path (exercises the dtype-aware tile-size model + f32 accumulation).
    x3 = jax.random.normal(jax.random.PRNGKey(2), (4, 16, 256), dtype=jnp.bfloat16)
    w3 = (1.0 + 0.1 * jax.random.normal(jax.random.PRNGKey(3), (256,))).astype(jnp.bfloat16)
    out3 = jax.block_until_ready(rmsnorm(x3, w3, eps=1e-5))
    ref3 = rmsnorm_ref(x3, w3, eps=1e-5)
    assert jnp.allclose(out3.astype(jnp.float32), ref3.astype(jnp.float32),
                        atol=2e-2, rtol=2e-2), "bf16 mismatch"

    print("KERNEL_OK")
</pallas_src>

<mosaic_0001>
module attributes {stable_mosaic.version = 11 : i64} {
  func.func @_rmsnorm_kernel(%arg0: i32, %arg1: memref<8x128xf32, #tpu.memory_space<vmem>>, %arg2: memref<1x128xf32, #tpu.memory_space<vmem>>, %arg3: memref<8x128xf32, #tpu.memory_space<vmem>>) attributes {dimension_semantics = [#tpu.dimension_semantics<parallel>], iteration_bounds = array<i64: 2>, scalar_prefetch = 0 : i64, scratch_operands = 0 : i64, tpu.core_type = #tpu.core_type<tc>, window_params = [{transform_indices = @transform_0, window_bounds = array<i64: 8, 128>}, {pipeline_mode = #tpu.pipeline_mode<synchronous>, transform_indices = @transform_1, window_bounds = array<i64: 1, 128>}, {transform_indices = @transform_2, window_bounds = array<i64: 8, 128>}]} {
    %c0 = arith.constant 0 : index
    %c0_0 = arith.constant 0 : index
    %0 = vector.load %arg1[%c0, %c0_0] : memref<8x128xf32, #tpu.memory_space<vmem>>, vector<8x128xf32>
    %c0_1 = arith.constant 0 : index
    %c0_2 = arith.constant 0 : index
    %1 = vector.load %arg2[%c0_1, %c0_2] : memref<1x128xf32, #tpu.memory_space<vmem>>, vector<1x128xf32>
    %2 = arith.mulf %0, %0 : vector<8x128xf32>
    %cst = arith.constant dense<0.000000e+00> : vector<8xf32>
    %3 = vector.multi_reduction <add>, %2, %cst [1] : vector<8x128xf32> to vector<8xf32>
    %4 = vector.shape_cast %3 : vector<8xf32> to vector<8x1xf32>
    %cst_3 = arith.constant 1.280000e+02 : f32
    %5 = vector.broadcast %cst_3 : f32 to vector<8x1xf32>
    %6 = arith.divf %4, %5 : vector<8x1xf32>
    %cst_4 = arith.constant 9.99999974E-6 : f32
    %7 = vector.broadcast %cst_4 : f32 to vector<8x1xf32>
    %8 = arith.addf %6, %7 : vector<8x1xf32>
    %9 = math.rsqrt %8 : vector<8x1xf32>
    %10 = vector.broadcast %9 : vector<8x1xf32> to vector<8x128xf32>
    %11 = arith.mulf %0, %10 : vector<8x128xf32>
    %12 = vector.broadcast %1 : vector<1x128xf32> to vector<8x128xf32>
    %13 = arith.mulf %11, %12 : vector<8x128xf32>
    %c0_5 = arith.constant 0 : index
    %c0_6 = arith.constant 0 : index
    %14 = vector.load %arg3[%c0_5, %c0_6] : memref<8x128xf32, #tpu.memory_space<vmem>>, vector<8x128xf32>
    tpu.vector_store %arg3[%c0_5, %c0_6], %13 {strides = array<i32>} : memref<8x128xf32, #tpu.memory_space<vmem>>, vector<8x128xf32>,
    return
  }
  func.func @transform_0(%arg0: i32) -> (i32, i32) {
    %c0_i32 = arith.constant 0 : i32
    %c0_i32_0 = arith.constant 0 : i32
    return %arg0, %c0_i32 : i32, i32
  }
  func.func @transform_1(%arg0: i32) -> (i32, i32) {
    %c0_i32 = arith.constant 0 : i32
    %c0_i32_0 = arith.constant 0 : i32
    %c0_i32_1 = arith.constant 0 : i32
    return %c0_i32, %c0_i32_0 : i32, i32
  }
  func.func @transform_2(%arg0: i32) -> (i32, i32) {
    %c0_i32 = arith.constant 0 : i32
    %c0_i32_0 = arith.constant 0 : i32
    return %arg0, %c0_i32 : i32, i32
  }
}

</mosaic_0001>

<llo_original>
// kernel: tpu_custom_call.1
$region0: #{tpu_custom_call.1}
  #allocation0 [shape = 'u32[]', space=smem, size = 0x4, offset = 0x4, fixed_abs, tag = 'smem constant byte address 0x4 - core index']
  #allocation1 [shape = 'u32[144,128]{1,0:T(1,128)}', space=vmem, size = 0x12000, scoped, tag = 'internal scratch']
  %s0 = inlined_call_operand.hbm [shape: f32[16,128], index: 0, kind: input, shape index: {}]
  %s1 = inlined_call_operand.vmem [shape: f32[1,128], index: 1, kind: input, shape index: {}]
  %s2 = inlined_call_operand.hbm [shape: f32[16,128], index: 2, kind: output, shape index: {}]
  %s3 = sld [smem:[#allocation0]]
  $region45: #{tpu_custom_call.1} parent=0
    _
  %s5 = ssub.s32 1, %s3
  %s6 = scalar_select 0, %s5, %s3
  $region1: #{tpu_custom_call.1} parent=0
    #allocation2 [shape = 'u8[8192]{0}', space=vmem, size = 0x2000, scoped, tag = 'input window, operand 0']
    #allocation3 [shape = 's32[2]{0}', space=sflag, size = 0x8, scoped, tag = 'scoped memory for tpu_custom_call.1']
    #allocation4 [shape = 's32[2]{0}', space=sflag, size = 0x8, scoped, tag = 'scoped memory for tpu_custom_call.1']
    #allocation5 [shape = 'u8[8192]{0}', space=vmem, size = 0x2000, scoped, tag = 'output window, operand 0']
    %7 = vsyncpa [#allocation3], 0
    %s8 = scalar_lea.sflag [#allocation3], 1
    %9 = vsyncpa %s8, 0
    %10 = vsyncpa [#allocation4], 0
    %s11 = scalar_lea.sflag [#allocation4], 1
    %12 = vsyncpa %s11, 0
    loop: start=0, step=1, limit=4
    $region2: #{tpu_custom_call.1} parent=1 // loop_pre_header
      _
    $region3: #{tpu_custom_call.1} parent=1 // loop_header
      %s14 = sphi 0, %s18
      %p15 = scmp.ge.s32.totalorder %s14, 4
      %s24 = sphi 0, %s26
      %s27 = sphi 0, %s24
      %s28 = sphi 0, %s27
      %s44 = sphi 0, %s28
      %s48 = sphi 0, %s48
      %s50 = sphi 0, %s48
      %s51 = sphi 0, %s50
      %s65 = sphi 0, %s51
      %s71 = sphi 0, %s73
      %s74 = sphi 0, %s71
      %s75 = sphi 0, %s74
      %s91 = sphi 0, %s75
    $region4: #{tpu_custom_call.1} parent=1 // loop_header_branch
      %17 = sbr.rel (%p15) target = $region8
    $region5: #{tpu_custom_call.1} parent=1 // loop_body
      %s19 = ssub.s32 %s14, 1
      %s20 = ssub.s32 %s14, 2
      %s21 = sadd.s32 %s14, 1
      %s22 = ssub.s32 %s14, %s21
      %p23 = scmp.eq.s32.totalorder %s22, 0
      %s25 = sadd.s32 %s24, 1
      %s26 = scalar_select %p23, %s24, %s25
      %p29 = pneg %p23
      %p30 = scmp.eq.s32.totalorder %s14, 1
      %p31 = por %p29, %p30
      %p32 = scmp.ne.s32.totalorder %s24, %s27
      %p33 = scmp.eq.s32.totalorder %s14, 0
      %p34 = por %p32, %p33
      %p35 = scmp.ne.s32.totalorder %s24, %s27
      %p36 = scmp.eq.s32.totalorder %s19, 1
      %p37 = por %p35, %p36
      %p38 = scmp.ne.s32.totalorder %s27, %s28
      %p39 = scmp.eq.s32.totalorder %s19, 0
      %p40 = por %p38, %p39
      %p41 = scmp.ne.s32.totalorder %s27, %s28
      %p42 = scmp.eq.s32.totalorder %s20, 1
      %p43 = por %p41, %p42
      %p45 = scmp.ne.s32.totalorder %s28, %s44
      %p46 = scmp.eq.s32.totalorder %s20, 0
      %p47 = por %p45, %p46
      %s49 = sadd.s32 %s48, 1
      %p52 = scmp.eq.s32.totalorder %s14, 1
      %p53 = scmp.ne.s32.totalorder %s48, %s50
      %p54 = scmp.eq.s32.totalorder %s14, 0
      %p55 = por %p53, %p54
      %p56 = scmp.ne.s32.totalorder %s48, %s50
      %p57 = scmp.eq.s32.totalorder %s19, 1
      %p58 = por %p56, %p57
      %p59 = scmp.ne.s32.totalorder %s50, %s51
      %p60 = scmp.eq.s32.totalorder %s19, 0
      %p61 = por %p59, %p60
      %p62 = scmp.ne.s32.totalorder %s50, %s51
      %p63 = scmp.eq.s32.totalorder %s20, 1
      %p64 = por %p62, %p63
      %p66 = scmp.ne.s32.totalorder %s51, %s65
      %p67 = scmp.eq.s32.totalorder %s20, 0
      %p68 = por %p66, %p67
      %s69 = ssub.s32 %s14, %s21
      %p70 = scmp.eq.s32.totalorder %s69, 0
      %s72 = sadd.s32 %s71, 1
      %s73 = scalar_select %p70, %s71, %s72
      %p76 = pneg %p70
      %p77 = scmp.eq.s32.totalorder %s14, 1
      %p78 = por %p76, %p77
      %p79 = scmp.ne.s32.totalorder %s71, %s74
      %p80 = scmp.eq.s32.totalorder %s14, 0
      %p81 = por %p79, %p80
      %p82 = scmp.ne.s32.totalorder %s71, %s74
      %p83 = scmp.eq.s32.totalorder %s19, 1
      %p84 = por %p82, %p83
      %p85 = scmp.ne.s32.totalorder %s74, %s75
      %p86 = scmp.eq.s32.totalorder %s19, 0
      %p87 = por %p85, %p86
      %p88 = scmp.ne.s32.totalorder %s74, %s75
      %p89 = scmp.eq.s32.totalorder %s20, 1
      %p90 = por %p88, %p89
      %p92 = scmp.ne.s32.totalorder %s75, %s91
      %p93 = scmp.eq.s32.totalorder %s20, 0
      %p94 = por %p92, %p93
      %p95 = scmp.le.s32.totalorder 1, %s14
      %p96 = scmp.lt.s32.totalorder %s14, 3
      %p97 = pnand %p95, %p96
      %p98 = pneg %p97
      // Predicated region
      $region9: #{tpu_custom_call.1} parent=5 // pred_check
        _
      $region10: #{tpu_custom_call.1} parent=5 // pred_check_branch
        %100 = sbr.rel (%p97) target = $region12
      $region11: #{tpu_custom_call.1} parent=5 // pred_region
        %s101 = ssub.s32 %s14, 1
        // Predicated region
        $region13: #{tpu_custom_call.1} parent=11 // pred_check
          %p102 = pneg %p61
        $region14: #{tpu_custom_call.1} parent=11 // pred_check_branch
          %104 = sbr.rel (%p102) target = $region16
        $region15: #{tpu_custom_call.1} parent=11 // pred_region
          _
        $region16: #{tpu_custom_call.1} parent=11 // pred_fallthru
          _
      $region12: #{tpu_custom_call.1} parent=5 // pred_fallthru
        _
      %p105 = scmp.lt.s32.totalorder %s14, 2
      // Predicated region
      $region17: #{tpu_custom_call.1} parent=5 // pred_check
        %p106 = pneg %p105
      $region18: #{tpu_custom_call.1} parent=5 // pred_check_branch
        %108 = sbr.rel (%p106) target = $region20
      $region19: #{tpu_custom_call.1} parent=5 // pred_region
        // Predicated region
        $region21: #{tpu_custom_call.1} parent=19 // pred_check
          %p109 = pneg %p34
        $region22: #{tpu_custom_call.1} parent=19 // pred_check_branch
          %111 = sbr.rel (%p109) target = $region24
        $region23: #{tpu_custom_call.1} parent=19 // pred_region
          %s112 = sand.u32 %s24, 1
          %s113 = scalar_lea.sflag [#allocation3], %s112
          %s114 = sand.u32 %s24, 1
          %s115 = smul.addr %s114, 8
          %s116 = scalar_lea.vmem [#allocation2], %s115
          %s118 = ssub.s32 128, 128
          %119 = vsyncadd %s113, %s118
          %s120 = smul.addr %s14, 128
          %s121 = scalar_lea.hbm %s0, %s120
          %s123 = sshll.u32 %s116, 4
          %s124 = int_to_ptr.vmem [resolvable:$true] %s123
          %126 = dma.hbm_to_vmem [thread:$0]  %s121, 128, %s124, %s113
        $region24: #{tpu_custom_call.1} parent=19 // pred_fallthru
          _
      $region20: #{tpu_custom_call.1} parent=5 // pred_fallthru
        _
      %p127 = scmp.le.s32.totalorder 1, %s14
      %p128 = scmp.lt.s32.totalorder %s14, 3
      %p129 = pnand %p127, %p128
      %p130 = pneg %p129
      // Predicated region
      $region25: #{tpu_custom_call.1} parent=5 // pred_check
        _
      $region26: #{tpu_custom_call.1} parent=5 // pred_check_branch
        %132 = sbr.rel (%p129) target = $region28
      $region27: #{tpu_custom_call.1} parent=5 // pred_region
        %s133 = ssub.s32 %s14, 1
        %s134 = sand.u32 %s27, 1
        %s135 = scalar_lea.sflag [#allocation3], %s134
        %s136 = sand.u32 %s27, 1
        %s137 = smul.addr %s136, 8
        %s138 = scalar_lea.vmem [#allocation2], %s137
        // Predicated region
        $region29: #{tpu_custom_call.1} parent=27 // pred_check
          %p139 = pneg %p40
        $region30: #{tpu_custom_call.1} parent=27 // pred_check_branch
          %141 = sbr.rel (%p139) target = $region32
        $region31: #{tpu_custom_call.1} parent=27 // pred_region
          %142 = dma.done %s135, 128
        $region32: #{tpu_custom_call.1} parent=27 // pred_fallthru
          _
        %s143 = sand.u32 %s27, 1
        %s144 = scalar_lea.sflag [#allocation3], %s143
        %s145 = sand.u32 %s27, 1
        %s146 = smul.addr %s145, 8
        %s147 = scalar_lea.vmem [#allocation2], %s146
        %p148 = pneg %p40
        %p149 = pneg %p37
        %p150 = pneg %p61
        %p151 = pneg %p58
        %p152 = pneg %p87
        %p153 = pneg %p84
        %s154 = sand.u32 %s74, 1
        %s155 = scalar_lea.sflag [#allocation4], %s154
        %s156 = sand.u32 %s74, 1
        %s157 = smul.addr %s156, 8
        %s158 = scalar_lea.vmem [#allocation5], %s157
        %v159 = vld [vmem:[%s138] sm:$0xff]
        %v160 = vld [vmem:[%s1] sm:$0x1]
        %v161 = vmul.f32 %v159, %v159
        %162 = vadd.xlane.f32.xlu0 %v161
        %v163 = vpop.xlane.xlu0 %162
        %v164 = vrcp.pop 128.0
        %v165 = vmul.f32 %v163, %v164
        %v166 = vadd.f32 %v165, 1e-05
        %v167 = vrsqrt.pop %v166
        %v168 = vmul.f32 %v159, %v167
        %v170 = vlaneseq
        %v171 = vshrl.u32 %v170, 7
        %v172 = vsub.s32 0, %v171
        %v173 = vrot.slane %v160, %v172
        %v175 = vmul.f32 %v168, %v173
        %176 = vst [vmem:[%s158] sm:$0xff] %v175
        %s177 = sand.u32 %s74, 1
        %s178 = scalar_lea.sflag [#allocation4], %s177
        %s179 = sand.u32 %s74, 1
        %s180 = smul.addr %s179, 8
        %s181 = scalar_lea.vmem [#allocation5], %s180
        // Predicated region
        $region33: #{tpu_custom_call.1} parent=27 // pred_check
          %p182 = pneg %p84
        $region34: #{tpu_custom_call.1} parent=27 // pred_check_branch
          %184 = sbr.rel (%p182) target = $region36
        $region35: #{tpu_custom_call.1} parent=27 // pred_region
          %s186 = ssub.s32 128, 128
          %187 = vsyncadd %s178, %s186
          %s188 = smul.addr %s19, 128
          %s189 = scalar_lea.hbm %s2, %s188
          %s191 = sshll.u32 %s181, 4
          %s192 = int_to_ptr.vmem [resolvable:$true] %s191
          %194 = dma.vmem_to_hbm [thread:$0]  %s192, 128, %s189, %s178
        $region36: #{tpu_custom_call.1} parent=27 // pred_fallthru
          _
      $region28: #{tpu_custom_call.1} parent=5 // pred_fallthru
        _
      %p195 = scmp.le.s32.totalorder 2, %s14
      // Predicated region
      $region37: #{tpu_custom_call.1} parent=5 // pred_check
        %p196 = pneg %p195
      $region38: #{tpu_custom_call.1} parent=5 // pred_check_branch
        %198 = sbr.rel (%p196) target = $region40
      $region39: #{tpu_custom_call.1} parent=5 // pred_region
        %s199 = ssub.s32 %s14, 2
        // Predicated region
        $region41: #{tpu_custom_call.1} parent=39 // pred_check
          %p200 = pneg %p90
        $region42: #{tpu_custom_call.1} parent=39 // pred_check_branch
          %202 = sbr.rel (%p200) target = $region44
        $region43: #{tpu_custom_call.1} parent=39 // pred_region
          %s203 = sand.u32 %s75, 1
          %s204 = scalar_lea.sflag [#allocation4], %s203
          %s205 = sand.u32 %s75, 1
          %s206 = smul.addr %s205, 8
          %s207 = scalar_lea.vmem [#allocation5], %s206
          %208 = dma.done %s204, 128
        $region44: #{tpu_custom_call.1} parent=39 // pred_fallthru
          _
      $region40: #{tpu_custom_call.1} parent=5 // pred_fallthru
        _
    $region6: #{tpu_custom_call.1} parent=1 // loop_footer
      %s18 = sadd.s32 1, %s14
    $region7: #{tpu_custom_call.1} parent=1 // loop_footer_branch
      %13 = sbr.rel target = $region3
    $region8: #{tpu_custom_call.1} parent=1 // loop_exit
      _
    %209 = vsyncpa [#allocation3], 1
    %s210 = scalar_lea.sflag [#allocation3], 1
    %211 = vsyncpa %s210, 1
    %212 = vsyncpa [#allocation4], 1
    %s213 = scalar_lea.sflag [#allocation4], 1
    %214 = vsyncpa %s213, 1

</llo_original>
